<compile_context>
chip_gen: v5e
topology: v5e:2x2
jax: 0.10.0
libtpu: 0.0.40
codegen_flags: <defaults>
</compile_context>

<pallas_src>
import functools

import jax
import jax.numpy as jnp
from jax.experimental import pallas as pl
from jax.experimental.pallas import tpu as pltpu

HIDDEN = 64        # logical hidden width (matches nn.Linear(., 64))
HIDDEN_PAD = 128   # lane-dense padded hidden width
LANE = 128
SUBLANE = 8
DEFAULT_TB = 2048  # batch tile (rows) — large tiles amortize per-step overhead


def _round_up(n, m):
    return (n + m - 1) // m * m


def _pad_to(a, shape):
    pads = [(0, s - d) for d, s in zip(a.shape, shape)]
    if all(p == (0, 0) for p in pads):
        return a
    return jnp.pad(a, pads)


def _default_act_dtype():
    """bf16 bias-add/tanh on v6e/v7x (bf16 VPU/EUP), f32 on v5e."""
    try:
        kind = jax.devices()[0].device_kind.lower()
    except Exception:
        kind = ""
    return jnp.float32 if "v5" in kind else jnp.bfloat16


def _mlp_kernel(x_ref, w1_ref, b1_ref, w2_ref, b2_ref, w3_ref, b3_ref, o_ref,
                *, act_dtype):
    # x cast f32 -> bf16 happens in-kernel (no wrapper HBM round trip).
    x = x_ref[...].astype(jnp.bfloat16)

    # Layer 1: (TB, in) @ (in, 128) + (1, 128) -> tanh
    # Dot accumulates in f32; bias add in f32; tanh in act_dtype
    # (bf16 on v6e/v7x, f32 on v5e).
    h1 = jnp.tanh(
        (jnp.dot(x, w1_ref[...], preferred_element_type=jnp.float32)
         + b1_ref[...]).astype(act_dtype))

    # Layer 2: (TB, 128) @ (128, 128) + (1, 128) -> tanh
    h2 = jnp.tanh(
        (jnp.dot(h1.astype(jnp.bfloat16), w2_ref[...],
                 preferred_element_type=jnp.float32)
         + b2_ref[...]).astype(act_dtype))

    # Output layer: (TB, 128) @ (128, out_pad) + (1, out_pad)  (no activation)
    o_ref[...] = (
        jnp.dot(h2.astype(jnp.bfloat16), w3_ref[...],
                preferred_element_type=jnp.float32)
        + b3_ref[...]
    ).astype(o_ref.dtype)


def prepare_params(params):
    """One-time padding + bf16 cast of the weights (hoisted out of the hot path)."""
    in_f = params["w1"].shape[0]
    out_f = params["w3"].shape[1]
    out_pad = _round_up(out_f, LANE)
    return {
        "w1": _pad_to(params["w1"], (in_f, HIDDEN_PAD)).astype(jnp.bfloat16),
        "b1": _pad_to(params["b1"], (1, HIDDEN_PAD)).astype(jnp.float32),
        "w2": _pad_to(params["w2"], (HIDDEN_PAD, HIDDEN_PAD)).astype(jnp.bfloat16),
        "b2": _pad_to(params["b2"], (1, HIDDEN_PAD)).astype(jnp.float32),
        "w3": _pad_to(params["w3"], (HIDDEN_PAD, out_pad)).astype(jnp.bfloat16),
        "b3": _pad_to(params["b3"], (1, out_pad)).astype(jnp.float32),
    }


@functools.partial(
    jax.jit,
    static_argnames=("out_features", "block_b", "act_dtype", "out_dtype"))
def actor_critic_forward(x, prepared, *, out_features, block_b=DEFAULT_TB,
                         act_dtype=jnp.bfloat16, out_dtype=jnp.bfloat16):
    """x: (B, in_features) f32. prepared: output of prepare_params."""
    B, in_f = x.shape
    out_pad = prepared["w3"].shape[1]

    # ---- Batch tiling -------------------------------------------------------
    # tb must be a multiple of 8 sublanes; cap at the padded batch; and emit at
    # least 2 tiles when the batch permits so v7x megacore has work for both
    # TensorCores (costs one extra ~0.35 us step on single-TC chips: negligible).
    b_pad8 = _round_up(B, SUBLANE)
    tb = min(_round_up(max(block_b, SUBLANE), SUBLANE), b_pad8)
    if b_pad8 >= 2 * SUBLANE:
        tb = min(tb, _round_up(pl.cdiv(b_pad8, 2), SUBLANE))
    nb = pl.cdiv(b_pad8, tb)
    b_pad = nb * tb

    # Pad the batch only when actually needed (common case: no pad, no copy).
    x_p = x if b_pad == B else _pad_to(x, (b_pad, in_f))

    resident = lambda shape: pl.BlockSpec(shape, lambda i: (0, 0))

    # VMEM budget: only set an explicit limit if the estimate approaches the
    # v5e 16 MiB scoped default (relevant for very large block_b).
    out_isz = jnp.dtype(out_dtype).itemsize
    w_bytes = sum(int(v.size) * v.dtype.itemsize for v in prepared.values())
    est_vmem = 2 * (tb * in_f * 4 + tb * out_pad * out_isz) + 2 * w_bytes
    cp_kwargs = dict(dimension_semantics=("parallel",))
    if est_vmem > 12 * 1024 * 1024:
        cp_kwargs["vmem_limit_bytes"] = int(est_vmem * 3 // 2)

    out_padded = pl.pallas_call(
        functools.partial(_mlp_kernel, act_dtype=act_dtype),
        out_shape=jax.ShapeDtypeStruct((b_pad, out_pad), out_dtype),
        grid=(nb,),
        in_specs=[
            pl.BlockSpec((tb, in_f), lambda i: (i, 0)),        # x: batch-tiled
            resident(prepared["w1"].shape), resident(prepared["b1"].shape),
            resident(prepared["w2"].shape), resident(prepared["b2"].shape),
            resident(prepared["w3"].shape), resident(prepared["b3"].shape),
        ],
        out_specs=pl.BlockSpec((tb, out_pad), lambda i: (i, 0)),
        compiler_params=pltpu.CompilerParams(**cp_kwargs),
    )(x_p, prepared["w1"], prepared["b1"], prepared["w2"], prepared["b2"],
      prepared["w3"], prepared["b3"])

    # Slice off lane/batch padding (bf16 slab -> half the read of the old f32
    # path; consumers that can use the padded slab may skip this entirely).
    return out_padded[:B, :out_features]


def init_params(key, in_features, out_features):
    """Deterministic init. Weights stored as (in, out) = PyTorch W.T."""
    ks = jax.random.split(key, 6)

    def lin(kw, kb, fan_in, fan_out):
        bound = 1.0 / jnp.sqrt(fan_in)
        w = jax.random.uniform(kw, (fan_in, fan_out), jnp.float32, -bound, bound)
        b = jax.random.uniform(kb, (1, fan_out), jnp.float32, -bound, bound)
        return w, b

    w1, b1 = lin(ks[0], ks[1], in_features, HIDDEN)
    w2, b2 = lin(ks[2], ks[3], HIDDEN, HIDDEN)
    w3, b3 = lin(ks[4], ks[5], HIDDEN, out_features)
    return {"w1": w1, "b1": b1, "w2": w2, "b2": b2, "w3": w3, "b3": b3}


def reference_forward(x, p, mxu_dtype=jnp.float32):
    def dot(a, w):
        return jnp.dot(a.astype(mxu_dtype), w.astype(mxu_dtype),
                       preferred_element_type=jnp.float32)

    h1 = jnp.tanh(dot(x, p["w1"]) + p["b1"])
    h2 = jnp.tanh(dot(h1, p["w2"]) + p["b2"])
    return dot(h2, p["w3"]) + p["b3"]


if __name__ == "__main__":
    key = jax.random.PRNGKey(0)
    k_param, k_x = jax.random.split(key)

    in_features, out_features, batch = 16, 8, 256
    params = init_params(k_param, in_features, out_features)
    prepared = prepare_params(params)          # one-time weight prep
    x = jax.random.normal(k_x, (batch, in_features), dtype=jnp.float32)

    act_dtype = _default_act_dtype()           # bf16 on v6e/v7x, f32 on v5e

    out = actor_critic_forward(
        x, prepared, out_features=out_features, act_dtype=act_dtype)
    out = jax.block_until_ready(out)
    assert out.shape == (batch, out_features)
    out_f32 = out.astype(jnp.float32)
    assert bool(jnp.all(jnp.isfinite(out_f32)))

    # Checks vs bf16-MXU-matched reference and pure-f32 reference (tolerances
    # account for the bf16 output stream + bf16 tanh fast path).
    ref_bf16 = reference_forward(x, params, mxu_dtype=jnp.bfloat16)
    ref_f32 = reference_forward(x, params, mxu_dtype=jnp.float32)
    assert jnp.allclose(out_f32, ref_bf16, atol=5e-2, rtol=5e-2)
    assert jnp.allclose(out_f32, ref_f32, atol=8e-2, rtol=8e-2)

    # TODO(synk): PyTorch's `.to('cpu')` is a host transfer, not a compute op;
    # the Pallas kernel simply returns the device array.
    print("KERNEL_OK")
</pallas_src>

<mosaic_0001>
module attributes {stable_mosaic.version = 11 : i64} {
  func.func @_mlp_kernel(%arg0: i32, %arg1: memref<128x16xf32, #tpu.memory_space<vmem>>, %arg2: memref<16x128xbf16, #tpu.memory_space<vmem>>, %arg3: memref<1x128xf32, #tpu.memory_space<vmem>>, %arg4: memref<128x128xbf16, #tpu.memory_space<vmem>>, %arg5: memref<1x128xf32, #tpu.memory_space<vmem>>, %arg6: memref<128x128xbf16, #tpu.memory_space<vmem>>, %arg7: memref<1x128xf32, #tpu.memory_space<vmem>>, %arg8: memref<128x128xbf16, #tpu.memory_space<vmem>>) attributes {dimension_semantics = [#tpu.dimension_semantics<parallel>], iteration_bounds = array<i64: 2>, scalar_prefetch = 0 : i64, scratch_operands = 0 : i64, tpu.core_type = #tpu.core_type<tc>, window_params = [{transform_indices = @transform_0, window_bounds = array<i64: 128, 16>}, {pipeline_mode = #tpu.pipeline_mode<synchronous>, transform_indices = @transform_1, window_bounds = array<i64: 16, 128>}, {pipeline_mode = #tpu.pipeline_mode<synchronous>, transform_indices = @transform_2, window_bounds = array<i64: 1, 128>}, {pipeline_mode = #tpu.pipeline_mode<synchronous>, transform_indices = @transform_3, window_bounds = array<i64: 128, 128>}, {pipeline_mode = #tpu.pipeline_mode<synchronous>, transform_indices = @transform_4, window_bounds = array<i64: 1, 128>}, {pipeline_mode = #tpu.pipeline_mode<synchronous>, transform_indices = @transform_5, window_bounds = array<i64: 128, 128>}, {pipeline_mode = #tpu.pipeline_mode<synchronous>, transform_indices = @transform_6, window_bounds = array<i64: 1, 128>}, {transform_indices = @transform_7, window_bounds = array<i64: 128, 128>}]} {
    %c0 = arith.constant 0 : index
    %c0_0 = arith.constant 0 : index
    %0 = vector.load %arg1[%c0, %c0_0] : memref<128x16xf32, #tpu.memory_space<vmem>>, vector<128x16xf32>
    %1 = arith.truncf %0 : vector<128x16xf32> to vector<128x16xbf16>
    %c0_1 = arith.constant 0 : index
    %c0_2 = arith.constant 0 : index
    %2 = vector.load %arg2[%c0_1, %c0_2] : memref<16x128xbf16, #tpu.memory_space<vmem>>, vector<16x128xbf16>
    %cst = arith.constant dense<0.000000e+00> : vector<128x128xf32>
    %3 = tpu.matmul %1, %2, %cst {dimension_numbers = #tpu.dot_dimension_numbers<[1], [0], [0], [1], [0, 0, 1, 1], [], []>} : vector<128x16xbf16>, vector<16x128xbf16>, vector<128x128xf32> -> vector<128x128xf32>
    %c0_3 = arith.constant 0 : index
    %c0_4 = arith.constant 0 : index
    %4 = vector.load %arg3[%c0_3, %c0_4] : memref<1x128xf32, #tpu.memory_space<vmem>>, vector<1x128xf32>
    %5 = vector.broadcast %4 : vector<1x128xf32> to vector<128x128xf32>
    %6 = arith.addf %3, %5 : vector<128x128xf32>
    %7 = arith.truncf %6 : vector<128x128xf32> to vector<128x128xbf16>
    %8 = math.tanh %7 : vector<128x128xbf16>
    %c0_5 = arith.constant 0 : index
    %c0_6 = arith.constant 0 : index
    %9 = vector.load %arg4[%c0_5, %c0_6] : memref<128x128xbf16, #tpu.memory_space<vmem>>, vector<128x128xbf16>
    %cst_7 = arith.constant dense<0.000000e+00> : vector<128x128xf32>
    %10 = tpu.matmul %8, %9, %cst_7 {dimension_numbers = #tpu.dot_dimension_numbers<[1], [0], [0], [1], [0, 0, 1, 1], [], []>} : vector<128x128xbf16>, vector<128x128xbf16>, vector<128x128xf32> -> vector<128x128xf32>
    %c0_8 = arith.constant 0 : index
    %c0_9 = arith.constant 0 : index
    %11 = vector.load %arg5[%c0_8, %c0_9] : memref<1x128xf32, #tpu.memory_space<vmem>>, vector<1x128xf32>
    %12 = vector.broadcast %11 : vector<1x128xf32> to vector<128x128xf32>
    %13 = arith.addf %10, %12 : vector<128x128xf32>
    %14 = arith.truncf %13 : vector<128x128xf32> to vector<128x128xbf16>
    %15 = math.tanh %14 : vector<128x128xbf16>
    %c0_10 = arith.constant 0 : index
    %c0_11 = arith.constant 0 : index
    %16 = vector.load %arg6[%c0_10, %c0_11] : memref<128x128xbf16, #tpu.memory_space<vmem>>, vector<128x128xbf16>
    %cst_12 = arith.constant dense<0.000000e+00> : vector<128x128xf32>
    %17 = tpu.matmul %15, %16, %cst_12 {dimension_numbers = #tpu.dot_dimension_numbers<[1], [0], [0], [1], [0, 0, 1, 1], [], []>} : vector<128x128xbf16>, vector<128x128xbf16>, vector<128x128xf32> -> vector<128x128xf32>
    %c0_13 = arith.constant 0 : index
    %c0_14 = arith.constant 0 : index
    %18 = vector.load %arg7[%c0_13, %c0_14] : memref<1x128xf32, #tpu.memory_space<vmem>>, vector<1x128xf32>
    %19 = vector.broadcast %18 : vector<1x128xf32> to vector<128x128xf32>
    %20 = arith.addf %17, %19 : vector<128x128xf32>
    %21 = arith.truncf %20 : vector<128x128xf32> to vector<128x128xbf16>
    %c0_15 = arith.constant 0 : index
    %c0_16 = arith.constant 0 : index
    %22 = vector.load %arg8[%c0_15, %c0_16] : memref<128x128xbf16, #tpu.memory_space<vmem>>, vector<128x128xbf16>
    tpu.vector_store %arg8[%c0_15, %c0_16], %21 {strides = array<i32>} : memref<128x128xbf16, #tpu.memory_space<vmem>>, vector<128x128xbf16>,
    return
  }
  func.func @transform_0(%arg0: i32) -> (i32, i32) {
    %c0_i32 = arith.constant 0 : i32
    %c0_i32_0 = arith.constant 0 : i32
    return %arg0, %c0_i32 : i32, i32
  }
  func.func @transform_1(%arg0: i32) -> (i32, i32) {
    %c0_i32 = arith.constant 0 : i32
    %c0_i32_0 = arith.constant 0 : i32
    %c0_i32_1 = arith.constant 0 : i32
    return %c0_i32, %c0_i32_0 : i32, i32
  }
  func.func @transform_2(%arg0: i32) -> (i32, i32) {
    %c0_i32 = arith.constant 0 : i32
    %c0_i32_0 = arith.constant 0 : i32
    %c0_i32_1 = arith.constant 0 : i32
    return %c0_i32, %c0_i32_0 : i32, i32
  }
  func.func @transform_3(%arg0: i32) -> (i32, i32) {
    %c0_i32 = arith.constant 0 : i32
    %c0_i32_0 = arith.constant 0 : i32
    %c0_i32_1 = arith.constant 0 : i32
    return %c0_i32, %c0_i32_0 : i32, i32
  }
  func.func @transform_4(%arg0: i32) -> (i32, i32) {
    %c0_i32 = arith.constant 0 : i32
    %c0_i32_0 = arith.constant 0 : i32
    %c0_i32_1 = arith.constant 0 : i32
    return %c0_i32, %c0_i32_0 : i32, i32
  }
  func.func @transform_5(%arg0: i32) -> (i32, i32) {
    %c0_i32 = arith.constant 0 : i32
    %c0_i32_0 = arith.constant 0 : i32
    %c0_i32_1 = arith.constant 0 : i32
    return %c0_i32, %c0_i32_0 : i32, i32
  }
  func.func @transform_6(%arg0: i32) -> (i32, i32) {
    %c0_i32 = arith.constant 0 : i32
    %c0_i32_0 = arith.constant 0 : i32
    %c0_i32_1 = arith.constant 0 : i32
    return %c0_i32, %c0_i32_0 : i32, i32
  }
  func.func @transform_7(%arg0: i32) -> (i32, i32) {
    %c0_i32 = arith.constant 0 : i32
    %c0_i32_0 = arith.constant 0 : i32
    return %arg0, %c0_i32 : i32, i32
  }
}

</mosaic_0001>

<llo_original>
// kernel: actor_critic_forward.1
$region0: #{actor_critic_forward.1}
  #allocation0 [shape = 'u32[]', space=smem, size = 0x4, offset = 0x4, fixed_abs, tag = 'smem constant byte address 0x4 - core index']
  #allocation1 [shape = 'u32[72,128]{1,0:T(1,128)}', space=vmem, size = 0x9000, scoped, tag = 'internal scratch']
  %s0 = inlined_call_operand.vmem [shape: f32[256,16], index: 0, kind: input, shape index: {}]
  %s1 = inlined_call_operand.vmem [shape: bf16[16,128], index: 1, kind: input, shape index: {}]
  %s2 = inlined_call_operand.vmem [shape: f32[1,128], index: 2, kind: input, shape index: {}]
  %s3 = inlined_call_operand.vmem [shape: bf16[128,128], index: 3, kind: input, shape index: {}]
  %s4 = inlined_call_operand.vmem [shape: f32[1,128], index: 4, kind: input, shape index: {}]
  %s5 = inlined_call_operand.vmem [shape: bf16[128,128], index: 5, kind: input, shape index: {}]
  %s6 = inlined_call_operand.vmem [shape: f32[1,128], index: 6, kind: input, shape index: {}]
  %s7 = inlined_call_operand.vmem [shape: bf16[256,128], index: 7, kind: output, shape index: {}]
  %s8 = sld [smem:[#allocation0]]
  $region61: #{actor_critic_forward.1} parent=0
    _
  %s10 = ssub.s32 1, %s8
  %s11 = scalar_select 0, %s10, %s8
  loop: start=0, step=1, limit=4
  $region2: #{actor_critic_forward.1} parent=0 // loop_pre_header
    _
  $region3: #{actor_critic_forward.1} parent=0 // loop_header
    %s13 = sphi 0, %s17
    %p14 = scmp.ge.s32.totalorder %s13, 4
    %s23 = sphi 0, %s25
    %s26 = sphi 0, %s23
    %s27 = sphi 0, %s26
    %s43 = sphi 0, %s27
    %s47 = sphi 0, %s47
    %s49 = sphi 0, %s47
    %s50 = sphi 0, %s49
    %s64 = sphi 0, %s50
    %s68 = sphi 0, %s68
    %s70 = sphi 0, %s68
    %s71 = sphi 0, %s70
    %s85 = sphi 0, %s71
    %s89 = sphi 0, %s89
    %s91 = sphi 0, %s89
    %s92 = sphi 0, %s91
    %s106 = sphi 0, %s92
    %s110 = sphi 0, %s110
    %s112 = sphi 0, %s110
    %s113 = sphi 0, %s112
    %s127 = sphi 0, %s113
    %s131 = sphi 0, %s131
    %s133 = sphi 0, %s131
    %s134 = sphi 0, %s133
    %s148 = sphi 0, %s134
    %s152 = sphi 0, %s152
    %s154 = sphi 0, %s152
    %s155 = sphi 0, %s154
    %s169 = sphi 0, %s155
    %s175 = sphi 0, %s177
    %s178 = sphi 0, %s175
    %s179 = sphi 0, %s178
    %s195 = sphi 0, %s179
  $region4: #{actor_critic_forward.1} parent=0 // loop_header_branch
    %16 = sbr.rel (%p14) target = $region8
  $region5: #{actor_critic_forward.1} parent=0 // loop_body
    %s18 = ssub.s32 %s13, 1
    %s19 = ssub.s32 %s13, 2
    %s20 = sadd.s32 %s13, 1
    %s21 = ssub.s32 %s13, %s20
    %p22 = scmp.eq.s32.totalorder %s21, 0
    %s24 = sadd.s32 %s23, 1
    %s25 = scalar_select %p22, %s23, %s24
    %p28 = pneg %p22
    %p29 = scmp.eq.s32.totalorder %s13, 1
    %p30 = por %p28, %p29
    %p31 = scmp.ne.s32.totalorder %s23, %s26
    %p32 = scmp.eq.s32.totalorder %s13, 0
    %p33 = por %p31, %p32
    %p34 = scmp.ne.s32.totalorder %s23, %s26
    %p35 = scmp.eq.s32.totalorder %s18, 1
    %p36 = por %p34, %p35
    %p37 = scmp.ne.s32.totalorder %s26, %s27
    %p38 = scmp.eq.s32.totalorder %s18, 0
    %p39 = por %p37, %p38
    %p40 = scmp.ne.s32.totalorder %s26, %s27
    %p41 = scmp.eq.s32.totalorder %s19, 1
    %p42 = por %p40, %p41
    %p44 = scmp.ne.s32.totalorder %s27, %s43
    %p45 = scmp.eq.s32.totalorder %s19, 0
    %p46 = por %p44, %p45
    %s48 = sadd.s32 %s47, 1
    %p51 = scmp.eq.s32.totalorder %s13, 1
    %p52 = scmp.ne.s32.totalorder %s47, %s49
    %p53 = scmp.eq.s32.totalorder %s13, 0
    %p54 = por %p52, %p53
    %p55 = scmp.ne.s32.totalorder %s47, %s49
    %p56 = scmp.eq.s32.totalorder %s18, 1
    %p57 = por %p55, %p56
    %p58 = scmp.ne.s32.totalorder %s49, %s50
    %p59 = scmp.eq.s32.totalorder %s18, 0
    %p60 = por %p58, %p59
    %p61 = scmp.ne.s32.totalorder %s49, %s50
    %p62 = scmp.eq.s32.totalorder %s19, 1
    %p63 = por %p61, %p62
    %p65 = scmp.ne.s32.totalorder %s50, %s64
    %p66 = scmp.eq.s32.totalorder %s19, 0
    %p67 = por %p65, %p66
    %s69 = sadd.s32 %s68, 1
    %p72 = scmp.eq.s32.totalorder %s13, 1
    %p73 = scmp.ne.s32.totalorder %s68, %s70
    %p74 = scmp.eq.s32.totalorder %s13, 0
    %p75 = por %p73, %p74
    %p76 = scmp.ne.s32.totalorder %s68, %s70
    %p77 = scmp.eq.s32.totalorder %s18, 1
    %p78 = por %p76, %p77
    %p79 = scmp.ne.s32.totalorder %s70, %s71
    %p80 = scmp.eq.s32.totalorder %s18, 0
    %p81 = por %p79, %p80
    %p82 = scmp.ne.s32.totalorder %s70, %s71
    %p83 = scmp.eq.s32.totalorder %s19, 1
    %p84 = por %p82, %p83
    %p86 = scmp.ne.s32.totalorder %s71, %s85
    %p87 = scmp.eq.s32.totalorder %s19, 0
    %p88 = por %p86, %p87
    %s90 = sadd.s32 %s89, 1
    %p93 = scmp.eq.s32.totalorder %s13, 1
    %p94 = scmp.ne.s32.totalorder %s89, %s91
    %p95 = scmp.eq.s32.totalorder %s13, 0
    %p96 = por %p94, %p95
    %p97 = scmp.ne.s32.totalorder %s89, %s91
    %p98 = scmp.eq.s32.totalorder %s18, 1
    %p99 = por %p97, %p98
    %p100 = scmp.ne.s32.totalorder %s91, %s92
    %p101 = scmp.eq.s32.totalorder %s18, 0
    %p102 = por %p100, %p101
    %p103 = scmp.ne.s32.totalorder %s91, %s92
    %p104 = scmp.eq.s32.totalorder %s19, 1
    %p105 = por %p103, %p104
    %p107 = scmp.ne.s32.totalorder %s92, %s106
    %p108 = scmp.eq.s32.totalorder %s19, 0
    %p109 = por %p107, %p108
    %s111 = sadd.s32 %s110, 1
    %p114 = scmp.eq.s32.totalorder %s13, 1
    %p115 = scmp.ne.s32.totalorder %s110, %s112
    %p116 = scmp.eq.s32.totalorder %s13, 0
    %p117 = por %p115, %p116
    %p118 = scmp.ne.s32.totalorder %s110, %s112
    %p119 = scmp.eq.s32.totalorder %s18, 1
    %p120 = por %p118, %p119
    %p121 = scmp.ne.s32.totalorder %s112, %s113
    %p122 = scmp.eq.s32.totalorder %s18, 0
    %p123 = por %p121, %p122
    %p124 = scmp.ne.s32.totalorder %s112, %s113
    %p125 = scmp.eq.s32.totalorder %s19, 1
    %p126 = por %p124, %p125
    %p128 = scmp.ne.s32.totalorder %s113, %s127
    %p129 = scmp.eq.s32.totalorder %s19, 0
    %p130 = por %p128, %p129
    %s132 = sadd.s32 %s131, 1
    %p135 = scmp.eq.s32.totalorder %s13, 1
    %p136 = scmp.ne.s32.totalorder %s131, %s133
    %p137 = scmp.eq.s32.totalorder %s13, 0
    %p138 = por %p136, %p137
    %p139 = scmp.ne.s32.totalorder %s131, %s133
    %p140 = scmp.eq.s32.totalorder %s18, 1
    %p141 = por %p139, %p140
    %p142 = scmp.ne.s32.totalorder %s133, %s134
    %p143 = scmp.eq.s32.totalorder %s18, 0
    %p144 = por %p142, %p143
    %p145 = scmp.ne.s32.totalorder %s133, %s134
    %p146 = scmp.eq.s32.totalorder %s19, 1
    %p147 = por %p145, %p146
    %p149 = scmp.ne.s32.totalorder %s134, %s148
    %p150 = scmp.eq.s32.totalorder %s19, 0
    %p151 = por %p149, %p150
    %s153 = sadd.s32 %s152, 1
    %p156 = scmp.eq.s32.totalorder %s13, 1
    %p157 = scmp.ne.s32.totalorder %s152, %s154
    %p158 = scmp.eq.s32.totalorder %s13, 0
    %p159 = por %p157, %p158
    %p160 = scmp.ne.s32.totalorder %s152, %s154
    %p161 = scmp.eq.s32.totalorder %s18, 1
    %p162 = por %p160, %p161
    %p163 = scmp.ne.s32.totalorder %s154, %s155
    %p164 = scmp.eq.s32.totalorder %s18, 0
    %p165 = por %p163, %p164
    %p166 = scmp.ne.s32.totalorder %s154, %s155
    %p167 = scmp.eq.s32.totalorder %s19, 1
    %p168 = por %p166, %p167
    %p170 = scmp.ne.s32.totalorder %s155, %s169
    %p171 = scmp.eq.s32.totalorder %s19, 0
    %p172 = por %p170, %p171
    %s173 = ssub.s32 %s13, %s20
    %p174 = scmp.eq.s32.totalorder %s173, 0
    %s176 = sadd.s32 %s175, 1
    %s177 = scalar_select %p174, %s175, %s176
    %p180 = pneg %p174
    %p181 = scmp.eq.s32.totalorder %s13, 1
    %p182 = por %p180, %p181
    %p183 = scmp.ne.s32.totalorder %s175, %s178
    %p184 = scmp.eq.s32.totalorder %s13, 0
    %p185 = por %p183, %p184
    %p186 = scmp.ne.s32.totalorder %s175, %s178
    %p187 = scmp.eq.s32.totalorder %s18, 1
    %p188 = por %p186, %p187
    %p189 = scmp.ne.s32.totalorder %s178, %s179
    %p190 = scmp.eq.s32.totalorder %s18, 0
    %p191 = por %p189, %p190
    %p192 = scmp.ne.s32.totalorder %s178, %s179
    %p193 = scmp.eq.s32.totalorder %s19, 1
    %p194 = por %p192, %p193
    %p196 = scmp.ne.s32.totalorder %s179, %s195
    %p197 = scmp.eq.s32.totalorder %s19, 0
    %p198 = por %p196, %p197
    %p199 = scmp.le.s32.totalorder 1, %s13
    %p200 = scmp.lt.s32.totalorder %s13, 3
    %p201 = pnand %p199, %p200
    %p202 = pneg %p201
    // Predicated region
    $region9: #{actor_critic_forward.1} parent=5 // pred_check
      _
    $region10: #{actor_critic_forward.1} parent=5 // pred_check_branch
      %204 = sbr.rel (%p201) target = $region12
    $region11: #{actor_critic_forward.1} parent=5 // pred_region
      %s205 = ssub.s32 %s13, 1
      // Predicated region
      $region13: #{actor_critic_forward.1} parent=11 // pred_check
        %p206 = pneg %p60
      $region14: #{actor_critic_forward.1} parent=11 // pred_check_branch
        %208 = sbr.rel (%p206) target = $region16
      $region15: #{actor_critic_forward.1} parent=11 // pred_region
        _
      $region16: #{actor_critic_forward.1} parent=11 // pred_fallthru
        _
      // Predicated region
      $region17: #{actor_critic_forward.1} parent=11 // pred_check
        %p209 = pneg %p81
      $region18: #{actor_critic_forward.1} parent=11 // pred_check_branch
        %211 = sbr.rel (%p209) target = $region20
      $region19: #{actor_critic_forward.1} parent=11 // pred_region
        _
      $region20: #{actor_critic_forward.1} parent=11 // pred_fallthru
        _
      // Predicated region
      $region21: #{actor_critic_forward.1} parent=11 // pred_check
        %p212 = pneg %p102
      $region22: #{actor_critic_forward.1} parent=11 // pred_check_branch
        %214 = sbr.rel (%p212) target = $region24
      $region23: #{actor_critic_forward.1} parent=11 // pred_region
        _
      $region24: #{actor_critic_forward.1} parent=11 // pred_fallthru
        _
      // Predicated region
      $region25: #{actor_critic_forward.1} parent=11 // pred_check
        %p215 = pneg %p123
      $region26: #{actor_critic_forward.1} parent=11 // pred_check_branch
        %217 = sbr.rel (%p215) target = $region28
      $region27: #{actor_critic_forward.1} parent=11 // pred_region
        _
      $region28: #{actor_critic_forward.1} parent=11 // pred_fallthru
        _
      // Predicated region
      $region29: #{actor_critic_forward.1} parent=11 // pred_check
        %p218 = pneg %p144
      $region30: #{actor_critic_forward.1} parent=11 // pred_check_branch
        %220 = sbr.rel (%p218) target = $region32
      $region31: #{actor_critic_forward.1} parent=11 // pred_region
        _
      $region32: #{actor_critic_forward.1} parent=11 // pred_fallthru
        _
      // Predicated region
      $region33: #{actor_critic_forward.1} parent=11 // pred_check
        %p221 = pneg %p165
      $region34: #{actor_critic_forward.1} parent=11 // pred_check_branch
        %223 = sbr.rel (%p221) target = $region36
      $region35: #{actor_critic_forward.1} parent=11 // pred_region
        _
      $region36: #{actor_critic_forward.1} parent=11 // pred_fallthru
        _
    $region12: #{actor_critic_forward.1} parent=5 // pred_fallthru
      _
    %p224 = scmp.lt.s32.totalorder %s13, 2
    // Predicated region
    $region37: #{actor_critic_forward.1} parent=5 // pred_check
      %p225 = pneg %p224
    $region38: #{actor_critic_forward.1} parent=5 // pred_check_branch
      %227 = sbr.rel (%p225) target = $region40
    $region39: #{actor_critic_forward.1} parent=5 // pred_region
      // Predicated region
      $region41: #{actor_critic_forward.1} parent=39 // pred_check
        %p228 = pneg %p33
      $region42: #{actor_critic_forward.1} parent=39 // pred_check_branch
        %230 = sbr.rel (%p228) target = $region44
      $region43: #{actor_critic_forward.1} parent=39 // pred_region
        %s231 = smul.u32 16, %s13
        %p232 = scmp.lt.s32.totalorder %s231, 31
        %s233 = scalar_select %p232, %s231, 31
        %s234 = smul.addr %s233, 8
        %s235 = scalar_lea.vmem %s0, %s234
        %s236 = smul.u32 16, %s13
      $region44: #{actor_critic_forward.1} parent=39 // pred_fallthru
        _
    $region40: #{actor_critic_forward.1} parent=5 // pred_fallthru
      _
    %p237 = scmp.le.s32.totalorder 1, %s13
    %p238 = scmp.lt.s32.totalorder %s13, 3
    %p239 = pnand %p237, %p238
    %p240 = pneg %p239
    // Predicated region
    $region45: #{actor_critic_forward.1} parent=5 // pred_check
      _
    $region46: #{actor_critic_forward.1} parent=5 // pred_check_branch
      %242 = sbr.rel (%p239) target = $region48
    $region47: #{actor_critic_forward.1} parent=5 // pred_region
      %s243 = ssub.s32 %s13, 1
      %s244 = smul.u32 16, %s18
      %p245 = scmp.lt.s32.totalorder %s244, 31
      %s246 = scalar_select %p245, %s244, 31
      %s247 = smul.addr %s246, 8
      %s248 = scalar_lea.vmem %s0, %s247
      %p249 = pneg %p39
      %p250 = pneg %p36
      %p251 = pneg %p60
      %p252 = pneg %p57
      %p253 = pneg %p81
      %p254 = pneg %p78
      %p255 = pneg %p102
      %p256 = pneg %p99
      %p257 = pneg %p123
      %p258 = pneg %p120
      %p259 = pneg %p144
      %p260 = pneg %p141
      %p261 = pneg %p165
      %p262 = pneg %p162
      %p263 = pneg %p191
      %p264 = pneg %p188
      %s265 = smul.u32 16, %s18
      %p266 = scmp.lt.s32.totalorder %s265, 31
      %s267 = scalar_select %p266, %s265, 31
      %s268 = smul.addr %s267, 4
      %s269 = scalar_lea.vmem %s7, %s268
      %s270 = smul.u32 16, %s18
      %p271 = scmp.lt.s32.totalorder %s270, 31
      %s272 = scalar_select %p271, %s270, 31
      %s273 = smul.addr %s272, 8
      %s274 = scalar_lea.vmem %s0, %s273
      %s275 = smul.u32 16, %s18
      %s276 = smul.u32 16, %s18
      %p277 = scmp.lt.s32.totalorder %s276, 31
      %s278 = scalar_select %p277, %s276, 31
      %s279 = smul.addr %s278, 4
      %s280 = scalar_lea.vmem %s7, %s279
      %s281 = smul.u32 16, %s18
      %v283 = vld [vmem:[%s274] sm:$0xff]
      %v284 = vld [vmem:[%s274 + $0x8] sm:$0xff]
      %v285 = vld [vmem:[%s274 + $0x10] sm:$0xff]
      %v286 = vld [vmem:[%s274 + $0x18] sm:$0xff]
      %v287 = vld [vmem:[%s274 + $0x20] sm:$0xff]
      %v288 = vld [vmem:[%s274 + $0x28] sm:$0xff]
      %v289 = vld [vmem:[%s274 + $0x30] sm:$0xff]
      %v290 = vld [vmem:[%s274 + $0x38] sm:$0xff]
      %v291 = vld [vmem:[%s274 + $0x40] sm:$0xff]
      %v292 = vld [vmem:[%s274 + $0x48] sm:$0xff]
      %v293 = vld [vmem:[%s274 + $0x50] sm:$0xff]
      %v294 = vld [vmem:[%s274 + $0x58] sm:$0xff]
      %v295 = vld [vmem:[%s274 + $0x60] sm:$0xff]
      %v296 = vld [vmem:[%s274 + $0x68] sm:$0xff]
      %v297 = vld [vmem:[%s274 + $0x70] sm:$0xff]
      %v298 = vld [vmem:[%s274 + $0x78] sm:$0xff]
      %v299 = vpack.c.bf16 %v284, %v283
      %v300 = vpack.c.bf16 %v286, %v285
      %v301 = vpack.c.bf16 %v288, %v287
      %v302 = vpack.c.bf16 %v290, %v289
      %v303 = vpack.c.bf16 %v292, %v291
      %v304 = vpack.c.bf16 %v294, %v293
      %v305 = vpack.c.bf16 %v296, %v295
      %v306 = vpack.c.bf16 %v298, %v297
      %v307 = vld [vmem:[%s1] sm:$0xf]
      %v308 = vld [vmem:[%s1 + $0x4] sm:$0xf]
      %v309 = vld [vmem:[%s2] sm:$0x1]
      %v311 = vperm.slane %v309, 0
      %v315 = vunpack.c.l.b16 %v307
      %v316 = vunpack.c.l.b16 %v308
      %v317 = vpack.c.b16 %v316, %v315
      %vm319 = vcmask 130048
      %v321 = vsel %vm319, %v299, 0
      %v324 = vsel %vm319, %v300, 0
      %v327 = vsel %vm319, %v301, 0
      %v330 = vsel %vm319, %v302, 0
      %v333 = vsel %vm319, %v303, 0
      %v336 = vsel %vm319, %v304, 0
      %v339 = vsel %vm319, %v305, 0
      %v342 = vsel %vm319, %v306, 0
      %344 = vmatpush.bf16.msra.mxu0 0
      %345 = vmatpush.bf16.msra.mxu0 0
      %346 = vmatpush.bf16.msra.mxu0 0
      %347 = vmatpush.bf16.msra.mxu0 0
      %348 = vmatpush.bf16.msra.mxu0 0
      %349 = vmatpush.bf16.msra.mxu0 0
      %350 = vmatpush.bf16.msra.mxu0 0
      %351 = vmatpush.bf16.msra.mxu0 %v317
      %352 = vmatmul.bf16.gmra.mxu0 %v321
      %v353 = vpop.f32.mrf.mxu0
      %v354 = vadd.f32 %v311, %v353
      %v355 = vpop.f32.mrf.mxu0
      %v356 = vadd.f32 %v311, %v355
      %357 = vmatmul.bf16.gmra.mxu0 %v324
      %v358 = vpop.f32.mrf.mxu0
      %v359 = vadd.f32 %v311, %v358
      %v360 = vpop.f32.mrf.mxu0
      %v361 = vadd.f32 %v311, %v360
      %362 = vmatmul.bf16.gmra.mxu0 %v327
      %v363 = vpop.f32.mrf.mxu0
      %v364 = vadd.f32 %v311, %v363
      %v365 = vpop.f32.mrf.mxu0
      %v366 = vadd.f32 %v311, %v365
      %367 = vmatmul.bf16.gmra.mxu0 %v330
      %v368 = vpop.f32.mrf.mxu0
      %v369 = vadd.f32 %v311, %v368
      %v370 = vpop.f32.mrf.mxu0
      %v371 = vadd.f32 %v311, %v370
      %372 = vmatmul.bf16.gmra.mxu0 %v333
      %v373 = vpop.f32.mrf.mxu0
      %v374 = vadd.f32 %v311, %v373
      %v375 = vpop.f32.mrf.mxu0
      %v376 = vadd.f32 %v311, %v375
      %377 = vmatmul.bf16.gmra.mxu0 %v336
      %v378 = vpop.f32.mrf.mxu0
      %v379 = vadd.f32 %v311, %v378
      %v380 = vpop.f32.mrf.mxu0
      %v381 = vadd.f32 %v311, %v380
      %382 = vmatmul.bf16.gmra.mxu0 %v339
      %v383 = vpop.f32.mrf.mxu0
      %v384 = vadd.f32 %v311, %v383
      %v385 = vpop.f32.mrf.mxu0
      %v386 = vadd.f32 %v311, %v385
      %387 = vmatmul.bf16.gmra.mxu0 %v342
      %v388 = vpop.f32.mrf.mxu0
      %v389 = vadd.f32 %v311, %v388
      %v390 = vpop.f32.mrf.mxu0
      %v391 = vadd.f32 %v311, %v390
      %392 = vdwg.mxu0
      %v393 = vpack.c.bf16 %v356, %v354
      %v394 = vpack.c.bf16 %v361, %v359
      %v395 = vpack.c.bf16 %v366, %v364
      %v396 = vpack.c.bf16 %v371, %v369
      %v397 = vpack.c.bf16 %v376, %v374
      %v398 = vpack.c.bf16 %v381, %v379
      %v399 = vpack.c.bf16 %v386, %v384
      %v400 = vpack.c.bf16 %v391, %v389
      %v401 = vunpack.c.l.bf16 %v393
      %v402 = vunpack.c.h.bf16 %v393
      %v403 = vunpack.c.l.bf16 %v394
      %v404 = vunpack.c.h.bf16 %v394
      %v405 = vunpack.c.l.bf16 %v395
      %v406 = vunpack.c.h.bf16 %v395
      %v407 = vunpack.c.l.bf16 %v396
      %v408 = vunpack.c.h.bf16 %v396
      %v409 = vunpack.c.l.bf16 %v397
      %v410 = vunpack.c.h.bf16 %v397
      %v411 = vunpack.c.l.bf16 %v398
      %v412 = vunpack.c.h.bf16 %v398
      %v413 = vunpack.c.l.bf16 %v399
      %v414 = vunpack.c.h.bf16 %v399
      %v415 = vunpack.c.l.bf16 %v400
      %v416 = vunpack.c.h.bf16 %v400
      %v417 = vtanh.pop %v401
      %v418 = vtanh.pop %v402
      %v419 = vtanh.pop %v403
      %v420 = vtanh.pop %v404
      %v421 = vtanh.pop %v405
      %v422 = vtanh.pop %v406
      %v423 = vtanh.pop %v407
      %v424 = vtanh.pop %v408
      %v425 = vtanh.pop %v409
      %v426 = vtanh.pop %v410
      %v427 = vtanh.pop %v411
      %v428 = vtanh.pop %v412
      %v429 = vtanh.pop %v413
      %v430 = vtanh.pop %v414
      %v431 = vtanh.pop %v415
      %v432 = vtanh.pop %v416
      %v433 = vpack.c.bf16 %v418, %v417
      %v434 = vpack.c.bf16 %v420, %v419
      %v435 = vpack.c.bf16 %v422, %v421
      %v436 = vpack.c.bf16 %v424, %v423
      %v437 = vpack.c.bf16 %v426, %v425
      %v438 = vpack.c.bf16 %v428, %v427
      %v439 = vpack.c.bf16 %v430, %v429
      %v440 = vpack.c.bf16 %v432, %v431
      %v441 = vld [vmem:[%s3] sm:$0xf]
      %v442 = vld [vmem:[%s3 + $0x4] sm:$0xf]
      %v443 = vld [vmem:[%s3 + $0x8] sm:$0xf]
      %v444 = vld [vmem:[%s3 + $0xc] sm:$0xf]
      %v445 = vld [vmem:[%s3 + $0x10] sm:$0xf]
      %v446 = vld [vmem:[%s3 + $0x14] sm:$0xf]
      %v447 = vld [vmem:[%s3 + $0x18] sm:$0xf]
      %v448 = vld [vmem:[%s3 + $0x1c] sm:$0xf]
      %v449 = vld [vmem:[%s3 + $0x20] sm:$0xf]
      %v450 = vld [vmem:[%s3 + $0x24] sm:$0xf]
      %v451 = vld [vmem:[%s3 + $0x28] sm:$0xf]
      %v452 = vld [vmem:[%s3 + $0x2c] sm:$0xf]
      %v453 = vld [vmem:[%s3 + $0x30] sm:$0xf]
      %v454 = vld [vmem:[%s3 + $0x34] sm:$0xf]
      %v455 = vld [vmem:[%s3 + $0x38] sm:$0xf]
      %v456 = vld [vmem:[%s3 + $0x3c] sm:$0xf]
      %v457 = vld [vmem:[%s4] sm:$0x1]
      %v459 = vperm.slane %v457, 0
      %v477 = vunpack.c.l.b16 %v441
      %v478 = vunpack.c.l.b16 %v442
      %v479 = vunpack.c.l.b16 %v443
      %v480 = vunpack.c.l.b16 %v444
      %v481 = vunpack.c.l.b16 %v445
      %v482 = vunpack.c.l.b16 %v446
      %v483 = vunpack.c.l.b16 %v447
      %v484 = vunpack.c.l.b16 %v448
      %v485 = vunpack.c.l.b16 %v449
      %v486 = vunpack.c.l.b16 %v450
      %v487 = vunpack.c.l.b16 %v451
      %v488 = vunpack.c.l.b16 %v452
      %v489 = vunpack.c.l.b16 %v453
      %v490 = vunpack.c.l.b16 %v454
      %v491 = vunpack.c.l.b16 %v455
      %v492 = vunpack.c.l.b16 %v456
      %v493 = vpack.c.b16 %v478, %v477
      %v494 = vpack.c.b16 %v480, %v479
      %v495 = vpack.c.b16 %v482, %v481
      %v496 = vpack.c.b16 %v484, %v483
      %v497 = vpack.c.b16 %v486, %v485
      %v498 = vpack.c.b16 %v488, %v487
      %v499 = vpack.c.b16 %v490, %v489
      %v500 = vpack.c.b16 %v492, %v491
      %509 = vmatpush.bf16.msra.mxu0 %v500
      %510 = vmatpush.bf16.msra.mxu0 %v499
      %511 = vmatpush.bf16.msra.mxu0 %v498
      %512 = vmatpush.bf16.msra.mxu0 %v497
      %513 = vmatpush.bf16.msra.mxu0 %v496
      %514 = vmatpush.bf16.msra.mxu0 %v495
      %515 = vmatpush.bf16.msra.mxu0 %v494
      %516 = vmatpush.bf16.msra.mxu0 %v493
      %517 = vmatmul.bf16.gmra.mxu0 %v433
      %v518 = vpop.f32.mrf.mxu0
      %v519 = vadd.f32 %v459, %v518
      %v520 = vpop.f32.mrf.mxu0
      %v521 = vadd.f32 %v459, %v520
      %522 = vmatmul.bf16.gmra.mxu0 %v434
      %v523 = vpop.f32.mrf.mxu0
      %v524 = vadd.f32 %v459, %v523
      %v525 = vpop.f32.mrf.mxu0
      %v526 = vadd.f32 %v459, %v525
      %527 = vmatmul.bf16.gmra.mxu0 %v435
      %v528 = vpop.f32.mrf.mxu0
      %v529 = vadd.f32 %v459, %v528
      %v530 = vpop.f32.mrf.mxu0
      %v531 = vadd.f32 %v459, %v530
      %532 = vmatmul.bf16.gmra.mxu0 %v436
      %v533 = vpop.f32.mrf.mxu0
      %v534 = vadd.f32 %v459, %v533
      %v535 = vpop.f32.mrf.mxu0
      %v536 = vadd.f32 %v459, %v535
      %537 = vmatmul.bf16.gmra.mxu0 %v437
      %v538 = vpop.f32.mrf.mxu0
      %v539 = vadd.f32 %v459, %v538
      %v540 = vpop.f32.mrf.mxu0
      %v541 = vadd.f32 %v459, %v540
      %542 = vmatmul.bf16.gmra.mxu0 %v438
      %v543 = vpop.f32.mrf.mxu0
      %v544 = vadd.f32 %v459, %v543
      %v545 = vpop.f32.mrf.mxu0
      %v546 = vadd.f32 %v459, %v545
      %547 = vmatmul.bf16.gmra.mxu0 %v439
      %v548 = vpop.f32.mrf.mxu0
      %v549 = vadd.f32 %v459, %v548
      %v550 = vpop.f32.mrf.mxu0
      %v551 = vadd.f32 %v459, %v550
      %552 = vmatmul.bf16.gmra.mxu0 %v440
      %v553 = vpop.f32.mrf.mxu0
      %v554 = vadd.f32 %v459, %v553
      %v555 = vpop.f32.mrf.mxu0
      %v556 = vadd.f32 %v459, %v555
      %557 = vdwg.mxu0
      %v558 = vpack.c.bf16 %v521, %v519
      %v559 = vpack.c.bf16 %v526, %v524
      %v560 = vpack.c.bf16 %v531, %v529
      %v561 = vpack.c.bf16 %v536, %v534
      %v562 = vpack.c.bf16 %v541, %v539
      %v563 = vpack.c.bf16 %v546, %v544
      %v564 = vpack.c.bf16 %v551, %v549
      %v565 = vpack.c.bf16 %v556, %v554
      %v566 = vunpack.c.l.bf16 %v558
      %v567 = vunpack.c.h.bf16 %v558
      %v568 = vunpack.c.l.bf16 %v559
      %v569 = vunpack.c.h.bf16 %v559
      %v570 = vunpack.c.l.bf16 %v560
      %v571 = vunpack.c.h.bf16 %v560
      %v572 = vunpack.c.l.bf16 %v561
      %v573 = vunpack.c.h.bf16 %v561
      %v574 = vunpack.c.l.bf16 %v562
      %v575 = vunpack.c.h.bf16 %v562
      %v576 = vunpack.c.l.bf16 %v563
      %v577 = vunpack.c.h.bf16 %v563
      %v578 = vunpack.c.l.bf16 %v564
      %v579 = vunpack.c.h.bf16 %v564
      %v580 = vunpack.c.l.bf16 %v565
      %v581 = vunpack.c.h.bf16 %v565
      %v582 = vtanh.pop %v566
      %v583 = vtanh.pop %v567
      %v584 = vtanh.pop %v568
      %v585 = vtanh.pop %v569
      %v586 = vtanh.pop %v570
      %v587 = vtanh.pop %v571
      %v588 = vtanh.pop %v572
      %v589 = vtanh.pop %v573
      %v590 = vtanh.pop %v574
      %v591 = vtanh.pop %v575
      %v592 = vtanh.pop %v576
      %v593 = vtanh.pop %v577
      %v594 = vtanh.pop %v578
      %v595 = vtanh.pop %v579
      %v596 = vtanh.pop %v580
      %v597 = vtanh.pop %v581
      %v598 = vpack.c.bf16 %v583, %v582
      %v599 = vpack.c.bf16 %v585, %v584
      %v600 = vpack.c.bf16 %v587, %v586
      %v601 = vpack.c.bf16 %v589, %v588
      %v602 = vpack.c.bf16 %v591, %v590
      %v603 = vpack.c.bf16 %v593, %v592
      %v604 = vpack.c.bf16 %v595, %v594
      %v605 = vpack.c.bf16 %v597, %v596
      %v606 = vld [vmem:[%s5] sm:$0xf]
      %v607 = vld [vmem:[%s5 + $0x4] sm:$0xf]
      %v608 = vld [vmem:[%s5 + $0x8] sm:$0xf]
      %v609 = vld [vmem:[%s5 + $0xc] sm:$0xf]
      %v610 = vld [vmem:[%s5 + $0x10] sm:$0xf]
      %v611 = vld [vmem:[%s5 + $0x14] sm:$0xf]
      %v612 = vld [vmem:[%s5 + $0x18] sm:$0xf]
      %v613 = vld [vmem:[%s5 + $0x1c] sm:$0xf]
      %v614 = vld [vmem:[%s5 + $0x20] sm:$0xf]
      %v615 = vld [vmem:[%s5 + $0x24] sm:$0xf]
      %v616 = vld [vmem:[%s5 + $0x28] sm:$0xf]
      %v617 = vld [vmem:[%s5 + $0x2c] sm:$0xf]
      %v618 = vld [vmem:[%s5 + $0x30] sm:$0xf]
      %v619 = vld [vmem:[%s5 + $0x34] sm:$0xf]
      %v620 = vld [vmem:[%s5 + $0x38] sm:$0xf]
      %v621 = vld [vmem:[%s5 + $0x3c] sm:$0xf]
      %v622 = vld [vmem:[%s6] sm:$0x1]
      %v624 = vperm.slane %v622, 0
      %v642 = vunpack.c.l.b16 %v606
      %v643 = vunpack.c.l.b16 %v607
      %v644 = vunpack.c.l.b16 %v608
      %v645 = vunpack.c.l.b16 %v609
      %v646 = vunpack.c.l.b16 %v610
      %v647 = vunpack.c.l.b16 %v611
      %v648 = vunpack.c.l.b16 %v612
      %v649 = vunpack.c.l.b16 %v613
      %v650 = vunpack.c.l.b16 %v614
      %v651 = vunpack.c.l.b16 %v615
      %v652 = vunpack.c.l.b16 %v616
      %v653 = vunpack.c.l.b16 %v617
      %v654 = vunpack.c.l.b16 %v618
      %v655 = vunpack.c.l.b16 %v619
      %v656 = vunpack.c.l.b16 %v620
      %v657 = vunpack.c.l.b16 %v621
      %v658 = vpack.c.b16 %v643, %v642
      %v659 = vpack.c.b16 %v645, %v644
      %v660 = vpack.c.b16 %v647, %v646
      %v661 = vpack.c.b16 %v649, %v648
      %v662 = vpack.c.b16 %v651, %v650
      %v663 = vpack.c.b16 %v653, %v652
      %v664 = vpack.c.b16 %v655, %v654
      %v665 = vpack.c.b16 %v657, %v656
      %674 = vmatpush.bf16.msra.mxu0 %v665
      %675 = vmatpush.bf16.msra.mxu0 %v664
      %676 = vmatpush.bf16.msra.mxu0 %v663
      %677 = vmatpush.bf16.msra.mxu0 %v662
      %678 = vmatpush.bf16.msra.mxu0 %v661
      %679 = vmatpush.bf16.msra.mxu0 %v660
      %680 = vmatpush.bf16.msra.mxu0 %v659
      %681 = vmatpush.bf16.msra.mxu0 %v658
      %682 = vmatmul.bf16.gmra.mxu0 %v598
      %v683 = vpop.f32.mrf.mxu0
      %v684 = vadd.f32 %v624, %v683
      %v685 = vpop.f32.mrf.mxu0
      %v686 = vadd.f32 %v624, %v685
      %687 = vmatmul.bf16.gmra.mxu0 %v599
      %v688 = vpop.f32.mrf.mxu0
      %v689 = vadd.f32 %v624, %v688
      %v690 = vpop.f32.mrf.mxu0
      %v691 = vadd.f32 %v624, %v690
      %692 = vmatmul.bf16.gmra.mxu0 %v600
      %v693 = vpop.f32.mrf.mxu0
      %v694 = vadd.f32 %v624, %v693
      %v695 = vpop.f32.mrf.mxu0
      %v696 = vadd.f32 %v624, %v695
      %697 = vmatmul.bf16.gmra.mxu0 %v601
      %v698 = vpop.f32.mrf.mxu0
      %v699 = vadd.f32 %v624, %v698
      %v700 = vpop.f32.mrf.mxu0
      %v701 = vadd.f32 %v624, %v700
      %702 = vmatmul.bf16.gmra.mxu0 %v602
      %v703 = vpop.f32.mrf.mxu0
      %v704 = vadd.f32 %v624, %v703
      %v705 = vpop.f32.mrf.mxu0
      %v706 = vadd.f32 %v624, %v705
      %707 = vmatmul.bf16.gmra.mxu0 %v603
      %v708 = vpop.f32.mrf.mxu0
      %v709 = vadd.f32 %v624, %v708
      %v710 = vpop.f32.mrf.mxu0
      %v711 = vadd.f32 %v624, %v710
      %712 = vmatmul.bf16.gmra.mxu0 %v604
      %v713 = vpop.f32.mrf.mxu0
      %v714 = vadd.f32 %v624, %v713
      %v715 = vpop.f32.mrf.mxu0
      %v716 = vadd.f32 %v624, %v715
      %717 = vmatmul.bf16.gmra.mxu0 %v605
      %v718 = vpop.f32.mrf.mxu0
      %v719 = vadd.f32 %v624, %v718
      %v720 = vpop.f32.mrf.mxu0
      %v721 = vadd.f32 %v624, %v720
      %722 = vdwg.mxu0
      %v723 = vpack.c.bf16 %v684, %v684
      %v724 = vpack.c.bf16 %v686, %v686
      %v725 = vpack.c.bf16 %v689, %v689
      %v726 = vpack.c.bf16 %v691, %v691
      %v727 = vpack.c.bf16 %v694, %v694
      %v728 = vpack.c.bf16 %v696, %v696
      %v729 = vpack.c.bf16 %v699, %v699
      %v730 = vpack.c.bf16 %v701, %v701
      %v731 = vpack.c.bf16 %v704, %v704
      %v732 = vpack.c.bf16 %v706, %v706
      %v733 = vpack.c.bf16 %v709, %v709
      %v734 = vpack.c.bf16 %v711, %v711
      %v735 = vpack.c.bf16 %v714, %v714
      %v736 = vpack.c.bf16 %v716, %v716
      %v737 = vpack.c.bf16 %v719, %v719
      %v738 = vpack.c.bf16 %v721, %v721
      %739 = vst [vmem:[%s280] sm:$0xf] %v723
      %740 = vst [vmem:[%s280 + $0x4] sm:$0xf] %v724
      %741 = vst [vmem:[%s280 + $0x8] sm:$0xf] %v725
      %742 = vst [vmem:[%s280 + $0xc] sm:$0xf] %v726
      %743 = vst [vmem:[%s280 + $0x10] sm:$0xf] %v727
      %744 = vst [vmem:[%s280 + $0x14] sm:$0xf] %v728
      %745 = vst [vmem:[%s280 + $0x18] sm:$0xf] %v729
      %746 = vst [vmem:[%s280 + $0x1c] sm:$0xf] %v730
      %747 = vst [vmem:[%s280 + $0x20] sm:$0xf] %v731
      %748 = vst [vmem:[%s280 + $0x24] sm:$0xf] %v732
      %749 = vst [vmem:[%s280 + $0x28] sm:$0xf] %v733
      %750 = vst [vmem:[%s280 + $0x2c] sm:$0xf] %v734
      %751 = vst [vmem:[%s280 + $0x30] sm:$0xf] %v735
      %752 = vst [vmem:[%s280 + $0x34] sm:$0xf] %v736
      %753 = vst [vmem:[%s280 + $0x38] sm:$0xf] %v737
      %754 = vst [vmem:[%s280 + $0x3c] sm:$0xf] %v738
      %s755 = smul.u32 16, %s18
      %p756 = scmp.lt.s32.totalorder %s755, 31
      %s757 = scalar_select %p756, %s755, 31
      %s758 = smul.addr %s757, 4
      %s759 = scalar_lea.vmem %s7, %s758
      // Predicated region
      $region49: #{actor_critic_forward.1} parent=47 // pred_check
        %p760 = pneg %p188
      $region50: #{actor_critic_forward.1} parent=47 // pred_check_branch
        %762 = sbr.rel (%p760) target = $region52
      $region51: #{actor_critic_forward.1} parent=47 // pred_region
        %s763 = smul.u32 16, %s18
      $region52: #{actor_critic_forward.1} parent=47 // pred_fallthru
        _
    $region48: #{actor_critic_forward.1} parent=5 // pred_fallthru
      _
    %p764 = scmp.le.s32.totalorder 2, %s13
    // Predicated region
    $region53: #{actor_critic_forward.1} parent=5 // pred_check
      %p765 = pneg %p764
    $region54: #{actor_critic_forward.1} parent=5 // pred_check_branch
      %767 = sbr.rel (%p765) target = $region56
    $region55: #{actor_critic_forward.1} parent=5 // pred_region
      %s768 = ssub.s32 %s13, 2
      // Predicated region
      $region57: #{actor_critic_forward.1} parent=55 // pred_check
        %p769 = pneg %p194
      $region58: #{actor_critic_forward.1} parent=55 // pred_check_branch
        %771 = sbr.rel (%p769) target = $region60
      $region59: #{actor_critic_forward.1} parent=55 // pred_region
        %s772 = smul.u32 16, %s19
        %p773 = scmp.lt.s32.totalorder %s772, 31
        %s774 = scalar_select %p773, %s772, 31
        %s775 = smul.addr %s774, 4
        %s776 = scalar_lea.vmem %s7, %s775
      $region60: #{actor_critic_forward.1} parent=55 // pred_fallthru
        _
    $region56: #{actor_critic_forward.1} parent=5 // pred_fallthru
      _
  $region6: #{actor_critic_forward.1} parent=0 // loop_footer
    %s17 = sadd.s32 1, %s13
  $region7: #{actor_critic_forward.1} parent=0 // loop_footer_branch
    %12 = sbr.rel target = $region3
  $region8: #{actor_critic_forward.1} parent=0 // loop_exit
    _

</llo_original>
